<compile_context>
chip_gen: v6e
topology: v6e:2x2x1
jax: 0.10.0
libtpu: 0.0.40
codegen_flags: <defaults>
</compile_context>

<pallas_src>
import functools

import jax
import jax.numpy as jnp
from jax.experimental import pallas as pl
from jax.experimental.pallas import tpu as pltpu

_LANES = 128
_SUBLANES = 8


def _make_kernel(n_linear: int, tb: int):
    """Fused MLP kernel for `n_linear` Linear layers.

    Ref order: x, w_0..w_{n-1}, b_0..b_{n-1}, out.
    Hidden layers use tanh; the final layer (output_size=1) is identity.
    """

    def kernel(x_ref, *refs):
        w_refs = refs[:n_linear]
        b_refs = refs[n_linear:2 * n_linear]
        o_ref = refs[2 * n_linear]

        h = x_ref[...].astype(jnp.float32)
        for i in range(n_linear - 1):
            h = jnp.tanh(
                jnp.dot(h, w_refs[i][...], preferred_element_type=jnp.float32)
                + b_refs[i][...]
            )
        out = (
            jnp.dot(h, w_refs[-1][...], preferred_element_type=jnp.float32)
            + b_refs[-1][...]
        )  # (tb, 1) — lane-sparse column
        # Lane-densify before the store: (tb, 1) -> (tb//128, 128).  Row-major
        # order is preserved; the relayout goes to the XLU (idle here) and the
        # store becomes full unmasked vst's instead of masked vst.msk.
        o_ref[...] = out.reshape(tb // _LANES, _LANES).astype(o_ref.dtype)

    return kernel


def _round_up(x: int, m: int) -> int:
    return ((x + m - 1) // m) * m


def _choose_batch_tile(batch: int, *, max_tile: int = 4096,
                       target_steps: int = 4, single_block_max: int = 2048) -> int:
    """Pick the batch tile.

    Small batches (<= ~2048 rows) use a single block (rounded up to 128 so the
    lane-dense output reshape works).  Larger batches use tiles that are a
    multiple of 1024 (= 8*128, so the (tb//128, 128) output block satisfies the
    (8,128) constraint), capped at `max_tile`, while keeping >= ~4 grid steps
    so both v7x TensorCores get work and the obs DMA double-buffers.
    """
    b_lanes = _round_up(batch, _LANES)
    if b_lanes <= single_block_max:
        return b_lanes  # single block; output block == full array dims
    step = _SUBLANES * _LANES  # 1024
    max_tile = max(step, (max_tile // step) * step)
    tb = _round_up(pl.cdiv(b_lanes, target_steps), step)
    return max(step, min(max_tile, tb))


@functools.partial(jax.jit, static_argnames=("tb",))
def _forward_tiled(obs, weights, biases, *, tb: int):
    batch, ob_dim = obs.shape
    n_linear = len(weights)
    grid = pl.cdiv(batch, tb)
    rows_pad = grid * tb  # ragged last block: Pallas masks OOB reads/writes
    kernel = _make_kernel(n_linear, tb)

    # Batch is tiled; every parameter tensor is one full block broadcast to
    # each grid step (tiny, stays resident in VMEM).
    x_spec = pl.BlockSpec((tb, ob_dim), lambda i: (i, 0))
    w_specs = [pl.BlockSpec(w.shape, lambda i: (0, 0)) for w in weights]
    b_specs = [pl.BlockSpec(b.shape, lambda i: (0, 0)) for b in biases]
    out_spec = pl.BlockSpec((tb // _LANES, _LANES), lambda i: (i, 0))

    out2d = pl.pallas_call(
        kernel,
        out_shape=jax.ShapeDtypeStruct((rows_pad // _LANES, _LANES), jnp.float32),
        grid_spec=pltpu.PrefetchScalarGridSpec(
            num_scalar_prefetch=0,
            grid=(grid,),
            in_specs=[x_spec] + w_specs + b_specs,
            out_specs=out_spec,
        ),
        compiler_params=pltpu.CompilerParams(
            dimension_semantics=("parallel",),
            vmem_limit_bytes=32 << 20,
        ),
    )(obs, *weights, *biases)

    # Row-major (rows_pad//128, 128) == (rows_pad, 1); drop the garbage tail
    # rows produced by the ragged last block.  Both ops fuse under this jit.
    return out2d.reshape(rows_pad, 1)[:batch]


def value_critic_forward(obs, weights, biases, *, max_tile: int = 4096):
    """Fused forward pass of ValueCritic.

    obs:      [B, ob_dim] float32
    weights:  tuple of [in, out] float32 arrays
    biases:   tuple of [1, out]  float32 arrays
    returns:  [B, 1] float32  (same semantics as self.network(obs))
    """
    batch = obs.shape[0]
    tb = _choose_batch_tile(batch, max_tile=max_tile)
    return _forward_tiled(obs, weights, biases, tb=tb)


def init_value_critic_params(key, ob_dim, n_layers, layer_size):
    """Deterministic parameter init matching build_mlp layer shapes."""
    dims = [ob_dim] + [layer_size] * n_layers + [1]
    weights, biases = [], []
    for i in range(len(dims) - 1):
        key, wk, bk = jax.random.split(key, 3)
        fan_in = dims[i]
        bound = 1.0 / jnp.sqrt(jnp.float32(fan_in))  # PyTorch Linear default range
        w = jax.random.uniform(wk, (dims[i], dims[i + 1]), jnp.float32, -bound, bound)
        b = jax.random.uniform(bk, (1, dims[i + 1]), jnp.float32, -bound, bound)
        weights.append(w)
        biases.append(b)
    return tuple(weights), tuple(biases)


def reference_forward(obs, weights, biases):
    h = obs
    for w, b in zip(weights[:-1], biases[:-1]):
        h = jnp.tanh(h @ w + b)
    return h @ weights[-1] + biases[-1]


if __name__ == "__main__":
    # ValueCritic(ob_dim=16, n_layers=2, layer_size=32, lr=...)
    ob_dim, n_layers, layer_size = 16, 2, 32

    key = jax.random.PRNGKey(0)
    key, params_key = jax.random.split(key)
    weights, biases = init_value_critic_params(params_key, ob_dim, n_layers, layer_size)

    # Case 1: tiny batch (single ragged block, tb rounded up to 128).
    batch = 16
    key, obs_key = jax.random.split(key)
    obs = jax.random.normal(obs_key, (batch, ob_dim), jnp.float32)
    values = jax.block_until_ready(value_critic_forward(obs, weights, biases))
    ref = reference_forward(obs, weights, biases)
    assert values.shape == (batch, 1)
    assert jnp.allclose(values, ref, atol=1e-5, rtol=1e-5), "mismatch (small batch)"

    # Case 2: batch not a multiple of 128 (single ragged block, no wrapper pad).
    batch2 = 200
    key, obs_key2 = jax.random.split(key)
    obs2 = jax.random.normal(obs_key2, (batch2, ob_dim), jnp.float32)
    values2 = jax.block_until_ready(value_critic_forward(obs2, weights, biases))
    ref2 = reference_forward(obs2, weights, biases)
    assert values2.shape == (batch2, 1)
    assert jnp.allclose(values2, ref2, atol=1e-5, rtol=1e-5), "mismatch (ragged single block)"

    # Case 3: multi-tile grid with a ragged last block (tb=1024, 3 grid steps).
    batch3 = 2500
    key, obs_key3 = jax.random.split(key)
    obs3 = jax.random.normal(obs_key3, (batch3, ob_dim), jnp.float32)
    values3 = jax.block_until_ready(value_critic_forward(obs3, weights, biases))
    ref3 = reference_forward(obs3, weights, biases)
    assert values3.shape == (batch3, 1)
    assert jnp.allclose(values3, ref3, atol=1e-5, rtol=1e-5), "mismatch (multi-tile)"

    print("KERNEL_OK")
</pallas_src>

<mosaic_0001>
module attributes {stable_mosaic.version = 11 : i64} {
  func.func @kernel(%arg0: i32, %arg1: memref<128x16xf32, #tpu.memory_space<vmem>>, %arg2: memref<16x32xf32, #tpu.memory_space<vmem>>, %arg3: memref<32x32xf32, #tpu.memory_space<vmem>>, %arg4: memref<32x1xf32, #tpu.memory_space<vmem>>, %arg5: memref<1x32xf32, #tpu.memory_space<vmem>>, %arg6: memref<1x32xf32, #tpu.memory_space<vmem>>, %arg7: memref<1x1xf32, #tpu.memory_space<vmem>>, %arg8: memref<1x128xf32, #tpu.memory_space<vmem>>) attributes {dimension_semantics = [#tpu.dimension_semantics<parallel>], iteration_bounds = array<i64: 1>, scalar_prefetch = 0 : i64, scratch_operands = 0 : i64, tpu.core_type = #tpu.core_type<tc>, window_params = [{transform_indices = @transform_0, window_bounds = array<i64: 128, 16>}, {pipeline_mode = #tpu.pipeline_mode<synchronous>, transform_indices = @transform_1, window_bounds = array<i64: 16, 32>}, {pipeline_mode = #tpu.pipeline_mode<synchronous>, transform_indices = @transform_2, window_bounds = array<i64: 32, 32>}, {pipeline_mode = #tpu.pipeline_mode<synchronous>, transform_indices = @transform_3, window_bounds = array<i64: 32, 1>}, {pipeline_mode = #tpu.pipeline_mode<synchronous>, transform_indices = @transform_4, window_bounds = array<i64: 1, 32>}, {pipeline_mode = #tpu.pipeline_mode<synchronous>, transform_indices = @transform_5, window_bounds = array<i64: 1, 32>}, {pipeline_mode = #tpu.pipeline_mode<synchronous>, transform_indices = @transform_6, window_bounds = array<i64: 1, 1>}, {transform_indices = @transform_7, window_bounds = array<i64: 1, 128>}]} {
    %c0 = arith.constant 0 : index
    %c0_0 = arith.constant 0 : index
    %0 = vector.load %arg1[%c0, %c0_0] : memref<128x16xf32, #tpu.memory_space<vmem>>, vector<128x16xf32>
    %c0_1 = arith.constant 0 : index
    %c0_2 = arith.constant 0 : index
    %1 = vector.load %arg2[%c0_1, %c0_2] : memref<16x32xf32, #tpu.memory_space<vmem>>, vector<16x32xf32>
    %cst = arith.constant dense<0.000000e+00> : vector<128x32xf32>
    %2 = tpu.matmul %0, %1, %cst {dimension_numbers = #tpu.dot_dimension_numbers<[1], [0], [0], [1], [0, 0, 1, 1], [], []>} : vector<128x16xf32>, vector<16x32xf32>, vector<128x32xf32> -> vector<128x32xf32>
    %c0_3 = arith.constant 0 : index
    %c0_4 = arith.constant 0 : index
    %3 = vector.load %arg5[%c0_3, %c0_4] : memref<1x32xf32, #tpu.memory_space<vmem>>, vector<1x32xf32>
    %4 = vector.broadcast %3 : vector<1x32xf32> to vector<128x32xf32>
    %5 = arith.addf %2, %4 : vector<128x32xf32>
    %6 = math.tanh %5 : vector<128x32xf32>
    %c0_5 = arith.constant 0 : index
    %c0_6 = arith.constant 0 : index
    %7 = vector.load %arg3[%c0_5, %c0_6] : memref<32x32xf32, #tpu.memory_space<vmem>>, vector<32x32xf32>
    %cst_7 = arith.constant dense<0.000000e+00> : vector<128x32xf32>
    %8 = tpu.matmul %6, %7, %cst_7 {dimension_numbers = #tpu.dot_dimension_numbers<[1], [0], [0], [1], [0, 0, 1, 1], [], []>} : vector<128x32xf32>, vector<32x32xf32>, vector<128x32xf32> -> vector<128x32xf32>
    %c0_8 = arith.constant 0 : index
    %c0_9 = arith.constant 0 : index
    %9 = vector.load %arg6[%c0_8, %c0_9] : memref<1x32xf32, #tpu.memory_space<vmem>>, vector<1x32xf32>
    %10 = vector.broadcast %9 : vector<1x32xf32> to vector<128x32xf32>
    %11 = arith.addf %8, %10 : vector<128x32xf32>
    %12 = math.tanh %11 : vector<128x32xf32>
    %c0_10 = arith.constant 0 : index
    %c0_11 = arith.constant 0 : index
    %13 = vector.load %arg4[%c0_10, %c0_11] : memref<32x1xf32, #tpu.memory_space<vmem>>, vector<32x1xf32>
    %cst_12 = arith.constant dense<0.000000e+00> : vector<128x1xf32>
    %14 = tpu.matmul %12, %13, %cst_12 {dimension_numbers = #tpu.dot_dimension_numbers<[1], [0], [0], [1], [0, 0, 1, 1], [], []>} : vector<128x32xf32>, vector<32x1xf32>, vector<128x1xf32> -> vector<128x1xf32>
    %c0_13 = arith.constant 0 : index
    %c0_14 = arith.constant 0 : index
    %15 = vector.load %arg7[%c0_13, %c0_14] : memref<1x1xf32, #tpu.memory_space<vmem>>, vector<1x1xf32>
    %16 = vector.broadcast %15 : vector<1x1xf32> to vector<128x1xf32>
    %17 = arith.addf %14, %16 : vector<128x1xf32>
    %18 = vector.shape_cast %17 : vector<128x1xf32> to vector<1x128xf32>
    %c0_15 = arith.constant 0 : index
    %c0_16 = arith.constant 0 : index
    %19 = vector.load %arg8[%c0_15, %c0_16] : memref<1x128xf32, #tpu.memory_space<vmem>>, vector<1x128xf32>
    tpu.vector_store %arg8[%c0_15, %c0_16], %18 {strides = array<i32>} : memref<1x128xf32, #tpu.memory_space<vmem>>, vector<1x128xf32>,
    return
  }
  func.func @transform_0(%arg0: i32) -> (i32, i32) {
    %c0_i32 = arith.constant 0 : i32
    %c0_i32_0 = arith.constant 0 : i32
    return %arg0, %c0_i32 : i32, i32
  }
  func.func @transform_1(%arg0: i32) -> (i32, i32) {
    %c0_i32 = arith.constant 0 : i32
    %c0_i32_0 = arith.constant 0 : i32
    %c0_i32_1 = arith.constant 0 : i32
    return %c0_i32, %c0_i32_0 : i32, i32
  }
  func.func @transform_2(%arg0: i32) -> (i32, i32) {
    %c0_i32 = arith.constant 0 : i32
    %c0_i32_0 = arith.constant 0 : i32
    %c0_i32_1 = arith.constant 0 : i32
    return %c0_i32, %c0_i32_0 : i32, i32
  }
  func.func @transform_3(%arg0: i32) -> (i32, i32) {
    %c0_i32 = arith.constant 0 : i32
    %c0_i32_0 = arith.constant 0 : i32
    %c0_i32_1 = arith.constant 0 : i32
    return %c0_i32, %c0_i32_0 : i32, i32
  }
  func.func @transform_4(%arg0: i32) -> (i32, i32) {
    %c0_i32 = arith.constant 0 : i32
    %c0_i32_0 = arith.constant 0 : i32
    %c0_i32_1 = arith.constant 0 : i32
    return %c0_i32, %c0_i32_0 : i32, i32
  }
  func.func @transform_5(%arg0: i32) -> (i32, i32) {
    %c0_i32 = arith.constant 0 : i32
    %c0_i32_0 = arith.constant 0 : i32
    %c0_i32_1 = arith.constant 0 : i32
    return %c0_i32, %c0_i32_0 : i32, i32
  }
  func.func @transform_6(%arg0: i32) -> (i32, i32) {
    %c0_i32 = arith.constant 0 : i32
    %c0_i32_0 = arith.constant 0 : i32
    %c0_i32_1 = arith.constant 0 : i32
    return %c0_i32, %c0_i32_0 : i32, i32
  }
  func.func @transform_7(%arg0: i32) -> (i32, i32) {
    %c0_i32 = arith.constant 0 : i32
    %c0_i32_0 = arith.constant 0 : i32
    return %arg0, %c0_i32 : i32, i32
  }
}

</mosaic_0001>

<llo_original>
// kernel: _forward_tiled.1
$region0: #{_forward_tiled.1}
  #allocation0 [shape = 'u32[]', space=smem, size = 0x4, offset = 0x4, fixed_abs, tag = 'smem constant byte address 0x4 - core index']
  #allocation1 [shape = 'u32[144,128]{1,0:T(1,128)}', space=vmem, size = 0x12000, scoped, tag = 'internal scratch']
  #allocation2 [shape = 'f32[1,1]{1,0:T(1,128)S(1)}', space=vmem, size = 0x200, scoped, tag = 'scoped memory for _forward_tiled.1']
  %s0 = inlined_call_operand.hbm [shape: f32[16,16], index: 0, kind: input, shape index: {}]
  %s1 = inlined_call_operand.hbm [shape: f32[16,32], index: 1, kind: input, shape index: {}]
  %s2 = inlined_call_operand.vmem [shape: f32[32,32], index: 2, kind: input, shape index: {}]
  %s3 = inlined_call_operand.vmem [shape: f32[32,1], index: 3, kind: input, shape index: {}]
  %s4 = inlined_call_operand.vmem [shape: f32[1,32], index: 4, kind: input, shape index: {}]
  %s5 = inlined_call_operand.vmem [shape: f32[1,32], index: 5, kind: input, shape index: {}]
  %s6 = inlined_call_operand.<no memory space> [shape: f32[1,1], index: 6, kind: input, shape index: {}]
  %s7 = inlined_call_operand.vmem [shape: f32[1,128], index: 7, kind: output, shape index: {}]
  %s8 = sld [smem:[#allocation0]]
  $region46: #{_forward_tiled.1} parent=0
    _
  %s10 = ssub.s32 1, %s8
  %s11 = scalar_select 0, %s10, %s8
  %v12 = vstv %s6
  %13 = vst [vmem:[#allocation2] sm:$0x1] %v12
  $region1: #{_forward_tiled.1} parent=0
    #allocation3 [shape = 'u8[65536]{0}', space=vmem, size = 0x10000, scoped, tag = 'input window, operand 0, single buffered']
    #allocation4 [shape = 's32[1]{0}', space=sflag, size = 0x4, scoped, tag = 'scoped memory for _forward_tiled.1']
    #allocation5 [shape = 'u8[8192]{0}', space=vmem, size = 0x2000, scoped, tag = 'input window, operand 1, single buffered']
    #allocation6 [shape = 's32[1]{0}', space=sflag, size = 0x4, scoped, tag = 'scoped memory for _forward_tiled.1']
    %14 = vsyncpa [#allocation4], 0
    %15 = vsyncpa [#allocation6], 0
    // Predicated region
    $region2: #{_forward_tiled.1} parent=1 // pred_check
      _
    $region3: #{_forward_tiled.1} parent=1 // pred_check_branch
      %17 = sbr.rel (0) target = $region5
    $region4: #{_forward_tiled.1} parent=1 // pred_region
      %s19 = ssub.s32 2048, 256
      %20 = vsyncadd [#allocation4], %s19
      %s21 = sshll.u32 [#allocation3], 4
      %s22 = int_to_ptr.vmem [resolvable:$true] %s21
      %27 = dma.hbm_to_vmem [thread:$0]  %s0, 256, %s22, [#allocation4], 128, 128, 8
    $region5: #{_forward_tiled.1} parent=1 // pred_fallthru
      _
    // Predicated region
    $region6: #{_forward_tiled.1} parent=1 // pred_check
      _
    $region7: #{_forward_tiled.1} parent=1 // pred_check_branch
      %29 = sbr.rel (0) target = $region9
    $region8: #{_forward_tiled.1} parent=1 // pred_region
      %s31 = ssub.s32 256, 256
      %32 = vsyncadd [#allocation6], %s31
      %s33 = sshll.u32 [#allocation5], 4
      %s34 = int_to_ptr.vmem [resolvable:$true] %s33
      %39 = dma.hbm_to_vmem [thread:$0]  %s1, 256, %s34, [#allocation6], 128, 128, 8
    $region9: #{_forward_tiled.1} parent=1 // pred_fallthru
      _
    // Predicated region
    $region10: #{_forward_tiled.1} parent=1 // pred_check
      _
    $region11: #{_forward_tiled.1} parent=1 // pred_check_branch
      %41 = sbr.rel (0) target = $region13
    $region12: #{_forward_tiled.1} parent=1 // pred_region
      _
    $region13: #{_forward_tiled.1} parent=1 // pred_fallthru
      _
    // Predicated region
    $region14: #{_forward_tiled.1} parent=1 // pred_check
      _
    $region15: #{_forward_tiled.1} parent=1 // pred_check_branch
      %43 = sbr.rel (0) target = $region17
    $region16: #{_forward_tiled.1} parent=1 // pred_region
      _
    $region17: #{_forward_tiled.1} parent=1 // pred_fallthru
      _
    // Predicated region
    $region18: #{_forward_tiled.1} parent=1 // pred_check
      _
    $region19: #{_forward_tiled.1} parent=1 // pred_check_branch
      %45 = sbr.rel (0) target = $region21
    $region20: #{_forward_tiled.1} parent=1 // pred_region
      _
    $region21: #{_forward_tiled.1} parent=1 // pred_fallthru
      _
    // Predicated region
    $region22: #{_forward_tiled.1} parent=1 // pred_check
      _
    $region23: #{_forward_tiled.1} parent=1 // pred_check_branch
      %47 = sbr.rel (0) target = $region25
    $region24: #{_forward_tiled.1} parent=1 // pred_region
      _
    $region25: #{_forward_tiled.1} parent=1 // pred_fallthru
      _
    // Predicated region
    $region26: #{_forward_tiled.1} parent=1 // pred_check
      _
    $region27: #{_forward_tiled.1} parent=1 // pred_check_branch
      %49 = sbr.rel (0) target = $region29
    $region28: #{_forward_tiled.1} parent=1 // pred_region
      _
    $region29: #{_forward_tiled.1} parent=1 // pred_fallthru
      _
    // Predicated region
    $region30: #{_forward_tiled.1} parent=1 // pred_check
      _
    $region31: #{_forward_tiled.1} parent=1 // pred_check_branch
      %51 = sbr.rel (0) target = $region33
    $region32: #{_forward_tiled.1} parent=1 // pred_region
      %52 = dma.done [#allocation4], 2048
    $region33: #{_forward_tiled.1} parent=1 // pred_fallthru
      _
    // Predicated region
    $region34: #{_forward_tiled.1} parent=1 // pred_check
      _
    $region35: #{_forward_tiled.1} parent=1 // pred_check_branch
      %54 = sbr.rel (0) target = $region37
    $region36: #{_forward_tiled.1} parent=1 // pred_region
      %55 = dma.done [#allocation6], 256
    $region37: #{_forward_tiled.1} parent=1 // pred_fallthru
      _
    %v56 = vld [vmem:[#allocation3] sm:$0xff]
    %v57 = vld [vmem:[#allocation3 + $0x8] sm:$0xff]
    %v58 = vld [vmem:[#allocation3 + $0x10] sm:$0xff]
    %v59 = vld [vmem:[#allocation3 + $0x18] sm:$0xff]
    %v60 = vld [vmem:[#allocation3 + $0x20] sm:$0xff]
    %v61 = vld [vmem:[#allocation3 + $0x28] sm:$0xff]
    %v62 = vld [vmem:[#allocation3 + $0x30] sm:$0xff]
    %v63 = vld [vmem:[#allocation3 + $0x38] sm:$0xff]
    %v64 = vld [vmem:[#allocation3 + $0x40] sm:$0xff]
    %v65 = vld [vmem:[#allocation3 + $0x48] sm:$0xff]
    %v66 = vld [vmem:[#allocation3 + $0x50] sm:$0xff]
    %v67 = vld [vmem:[#allocation3 + $0x58] sm:$0xff]
    %v68 = vld [vmem:[#allocation3 + $0x60] sm:$0xff]
    %v69 = vld [vmem:[#allocation3 + $0x68] sm:$0xff]
    %v70 = vld [vmem:[#allocation3 + $0x70] sm:$0xff]
    %v71 = vld [vmem:[#allocation3 + $0x78] sm:$0xff]
    %v72 = vld [vmem:[#allocation5] sm:$0xff]
    %v73 = vld [vmem:[#allocation5 + $0x8] sm:$0xff]
    %v74 = vld [vmem:[%s4] sm:$0x1]
    %v76 = vlaneseq
    %v77 = vshrl.u32 %v76, 7
    %v78 = vsub.s32 0, %v77
    %v79 = vrot.slane %v74, %v78
    %vm81 = vcmask 130048
    %v83 = vsel %vm81, %v56, 0
    %v86 = vsel %vm81, %v57, 0
    %v89 = vsel %vm81, %v58, 0
    %v92 = vsel %vm81, %v59, 0
    %v95 = vsel %vm81, %v60, 0
    %v98 = vsel %vm81, %v61, 0
    %v101 = vsel %vm81, %v62, 0
    %v104 = vsel %vm81, %v63, 0
    %v107 = vsel %vm81, %v64, 0
    %v110 = vsel %vm81, %v65, 0
    %v113 = vsel %vm81, %v66, 0
    %v116 = vsel %vm81, %v67, 0
    %v119 = vsel %vm81, %v68, 0
    %v122 = vsel %vm81, %v69, 0
    %v125 = vsel %vm81, %v70, 0
    %v128 = vsel %vm81, %v71, 0
    %130 = vmatprep.subr.mxu0 0.0
    %131 = vmatpush1.msra.mxu0 0.0
    %132 = vmatprep.subr.mxu0 0.0
    %133 = vmatpush1.msra.mxu0 0.0
    %134 = vmatprep.subr.mxu0 0.0
    %135 = vmatpush1.msra.mxu0 0.0
    %136 = vmatprep.subr.mxu0 0.0
    %137 = vmatpush1.msra.mxu0 0.0
    %138 = vmatprep.subr.mxu0 0.0
    %139 = vmatpush1.msra.mxu0 0.0
    %140 = vmatprep.subr.mxu0 0.0
    %141 = vmatpush1.msra.mxu0 0.0
    %142 = vmatprep.subr.mxu0 0.0
    %143 = vmatpush1.msra.mxu0 0.0
    %144 = vmatprep.subr.mxu0 0.0
    %145 = vmatpush1.msra.mxu0 0.0
    %146 = vmatprep.subr.mxu0 0.0
    %147 = vmatpush1.msra.mxu0 0.0
    %148 = vmatprep.subr.mxu0 0.0
    %149 = vmatpush1.msra.mxu0 0.0
    %150 = vmatprep.subr.mxu0 0.0
    %151 = vmatpush1.msra.mxu0 0.0
    %152 = vmatprep.subr.mxu0 0.0
    %153 = vmatpush1.msra.mxu0 0.0
    %154 = vmatprep.subr.mxu0 0.0
    %155 = vmatpush1.msra.mxu0 0.0
    %156 = vmatprep.subr.mxu0 0.0
    %157 = vmatpush1.msra.mxu0 0.0
    %158 = vmatprep.subr.mxu0 0.0
    %159 = vmatpush1.msra.mxu0 %v73
    %160 = vmatprep.subr.mxu0 0.0
    %161 = vmatpush1.msra.mxu0 %v72
    %162 = vmatprep.subr.mxu0 0.0
    %163 = vmatpush2.msra.mxu0 0.0
    %164 = vmatprep.subr.mxu0 0.0
    %165 = vmatpush2.msra.mxu0 0.0
    %166 = vmatprep.subr.mxu0 0.0
    %167 = vmatpush2.msra.mxu0 0.0
    %168 = vmatprep.subr.mxu0 0.0
    %169 = vmatpush2.msra.mxu0 0.0
    %170 = vmatprep.subr.mxu0 0.0
    %171 = vmatpush2.msra.mxu0 0.0
    %172 = vmatprep.subr.mxu0 0.0
    %173 = vmatpush2.msra.mxu0 0.0
    %174 = vmatprep.subr.mxu0 0.0
    %175 = vmatpush2.msra.mxu0 0.0
    %176 = vmatprep.subr.mxu0 0.0
    %177 = vmatpush2.msra.mxu0 0.0
    %178 = vmatprep.subr.mxu0 0.0
    %179 = vmatpush2.msra.mxu0 0.0
    %180 = vmatprep.subr.mxu0 0.0
    %181 = vmatpush2.msra.mxu0 0.0
    %182 = vmatprep.subr.mxu0 0.0
    %183 = vmatpush2.msra.mxu0 0.0
    %184 = vmatprep.subr.mxu0 0.0
    %185 = vmatpush2.msra.mxu0 0.0
    %186 = vmatprep.subr.mxu0 0.0
    %187 = vmatpush2.msra.mxu0 0.0
    %188 = vmatprep.subr.mxu0 0.0
    %189 = vmatpush2.msra.mxu0 0.0
    %190 = vmatprep.subr.mxu0 0.0
    %191 = vmatpush2.msra.mxu0 0.0
    %192 = vmatprep.subr.mxu0 0.0
    %193 = vmatpush2.msra.mxu0 0.0
    %194 = vmatprep.mubr.f32.mxu0 0.0
    %195 = vmatmul.mubr.f32.gmra.mxu0 %v83
    %v196 = vpop.f32.mrf.mxu0
    %v197 = vadd.f32 %v79, %v196
    %v198 = vpop.f32.mrf.mxu0
    %199 = vmatprep.mubr.f32.mxu0 0.0
    %200 = vmatmul.mubr.f32.gmra.mxu0 %v86
    %v201 = vpop.f32.mrf.mxu0
    %v202 = vadd.f32 %v79, %v201
    %v203 = vpop.f32.mrf.mxu0
    %204 = vmatprep.mubr.f32.mxu0 0.0
    %205 = vmatmul.mubr.f32.gmra.mxu0 %v89
    %v206 = vpop.f32.mrf.mxu0
    %v207 = vadd.f32 %v79, %v206
    %v208 = vpop.f32.mrf.mxu0
    %209 = vmatprep.mubr.f32.mxu0 0.0
    %210 = vmatmul.mubr.f32.gmra.mxu0 %v92
    %v211 = vpop.f32.mrf.mxu0
    %v212 = vadd.f32 %v79, %v211
    %v213 = vpop.f32.mrf.mxu0
    %214 = vmatprep.mubr.f32.mxu0 0.0
    %215 = vmatmul.mubr.f32.gmra.mxu0 %v95
    %v216 = vpop.f32.mrf.mxu0
    %v217 = vadd.f32 %v79, %v216
    %v218 = vpop.f32.mrf.mxu0
    %219 = vmatprep.mubr.f32.mxu0 0.0
    %220 = vmatmul.mubr.f32.gmra.mxu0 %v98
    %v221 = vpop.f32.mrf.mxu0
    %v222 = vadd.f32 %v79, %v221
    %v223 = vpop.f32.mrf.mxu0
    %224 = vmatprep.mubr.f32.mxu0 0.0
    %225 = vmatmul.mubr.f32.gmra.mxu0 %v101
    %v226 = vpop.f32.mrf.mxu0
    %v227 = vadd.f32 %v79, %v226
    %v228 = vpop.f32.mrf.mxu0
    %229 = vmatprep.mubr.f32.mxu0 0.0
    %230 = vmatmul.mubr.f32.gmra.mxu0 %v104
    %v231 = vpop.f32.mrf.mxu0
    %v232 = vadd.f32 %v79, %v231
    %v233 = vpop.f32.mrf.mxu0
    %234 = vmatprep.mubr.f32.mxu0 0.0
    %235 = vmatmul.mubr.f32.gmra.mxu0 %v107
    %v236 = vpop.f32.mrf.mxu0
    %v237 = vadd.f32 %v79, %v236
    %v238 = vpop.f32.mrf.mxu0
    %239 = vmatprep.mubr.f32.mxu0 0.0
    %240 = vmatmul.mubr.f32.gmra.mxu0 %v110
    %v241 = vpop.f32.mrf.mxu0
    %v242 = vadd.f32 %v79, %v241
    %v243 = vpop.f32.mrf.mxu0
    %244 = vmatprep.mubr.f32.mxu0 0.0
    %245 = vmatmul.mubr.f32.gmra.mxu0 %v113
    %v246 = vpop.f32.mrf.mxu0
    %v247 = vadd.f32 %v79, %v246
    %v248 = vpop.f32.mrf.mxu0
    %249 = vmatprep.mubr.f32.mxu0 0.0
    %250 = vmatmul.mubr.f32.gmra.mxu0 %v116
    %v251 = vpop.f32.mrf.mxu0
    %v252 = vadd.f32 %v79, %v251
    %v253 = vpop.f32.mrf.mxu0
    %254 = vmatprep.mubr.f32.mxu0 0.0
    %255 = vmatmul.mubr.f32.gmra.mxu0 %v119
    %v256 = vpop.f32.mrf.mxu0
    %v257 = vadd.f32 %v79, %v256
    %v258 = vpop.f32.mrf.mxu0
    %259 = vmatprep.mubr.f32.mxu0 0.0
    %260 = vmatmul.mubr.f32.gmra.mxu0 %v122
    %v261 = vpop.f32.mrf.mxu0
    %v262 = vadd.f32 %v79, %v261
    %v263 = vpop.f32.mrf.mxu0
    %264 = vmatprep.mubr.f32.mxu0 0.0
    %265 = vmatmul.mubr.f32.gmra.mxu0 %v125
    %v266 = vpop.f32.mrf.mxu0
    %v267 = vadd.f32 %v79, %v266
    %v268 = vpop.f32.mrf.mxu0
    %269 = vmatprep.mubr.f32.mxu0 0.0
    %270 = vmatmul.mubr.f32.gmra.mxu0 %v128
    %v271 = vpop.f32.mrf.mxu0
    %v272 = vadd.f32 %v79, %v271
    %v273 = vpop.f32.mrf.mxu0
    %274 = vdwg.mxu0
    %v275 = vtanh.pop %v197
    %v276 = vtanh.pop %v202
    %v277 = vtanh.pop %v207
    %v278 = vtanh.pop %v212
    %v279 = vtanh.pop %v217
    %v280 = vtanh.pop %v222
    %v281 = vtanh.pop %v227
    %v282 = vtanh.pop %v232
    %v283 = vtanh.pop %v237
    %v284 = vtanh.pop %v242
    %v285 = vtanh.pop %v247
    %v286 = vtanh.pop %v252
    %v287 = vtanh.pop %v257
    %v288 = vtanh.pop %v262
    %v289 = vtanh.pop %v267
    %v290 = vtanh.pop %v272
    %v291 = vld [vmem:[%s2] sm:$0xff]
    %v292 = vld [vmem:[%s2 + $0x8] sm:$0xff]
    %v293 = vld [vmem:[%s2 + $0x10] sm:$0xff]
    %v294 = vld [vmem:[%s2 + $0x18] sm:$0xff]
    %v295 = vld [vmem:[%s5] sm:$0x1]
    %v297 = vlaneseq
    %v298 = vshrl.u32 %v297, 7
    %v299 = vsub.s32 0, %v298
    %v300 = vrot.slane %v295, %v299
    %vm302 = vcmask 261120
    %v304 = vsel %vm302, %v275, 0
    %v307 = vsel %vm302, %v276, 0
    %v310 = vsel %vm302, %v277, 0
    %v313 = vsel %vm302, %v278, 0
    %v316 = vsel %vm302, %v279, 0
    %v319 = vsel %vm302, %v280, 0
    %v322 = vsel %vm302, %v281, 0
    %v325 = vsel %vm302, %v282, 0
    %v328 = vsel %vm302, %v283, 0
    %v331 = vsel %vm302, %v284, 0
    %v334 = vsel %vm302, %v285, 0
    %v337 = vsel %vm302, %v286, 0
    %v340 = vsel %vm302, %v287, 0
    %v343 = vsel %vm302, %v288, 0
    %v346 = vsel %vm302, %v289, 0
    %v349 = vsel %vm302, %v290, 0
    %351 = vmatprep.subr.mxu0 0.0
    %352 = vmatpush1.msra.mxu0 0.0
    %353 = vmatprep.subr.mxu0 0.0
    %354 = vmatpush1.msra.mxu0 0.0
    %355 = vmatprep.subr.mxu0 0.0
    %356 = vmatpush1.msra.mxu0 0.0
    %357 = vmatprep.subr.mxu0 0.0
    %358 = vmatpush1.msra.mxu0 0.0
    %359 = vmatprep.subr.mxu0 0.0
    %360 = vmatpush1.msra.mxu0 0.0
    %361 = vmatprep.subr.mxu0 0.0
    %362 = vmatpush1.msra.mxu0 0.0
    %363 = vmatprep.subr.mxu0 0.0
    %364 = vmatpush1.msra.mxu0 0.0
    %365 = vmatprep.subr.mxu0 0.0
    %366 = vmatpush1.msra.mxu0 0.0
    %367 = vmatprep.subr.mxu0 0.0
    %368 = vmatpush1.msra.mxu0 0.0
    %369 = vmatprep.subr.mxu0 0.0
    %370 = vmatpush1.msra.mxu0 0.0
    %371 = vmatprep.subr.mxu0 0.0
    %372 = vmatpush1.msra.mxu0 0.0
    %373 = vmatprep.subr.mxu0 0.0
    %374 = vmatpush1.msra.mxu0 0.0
    %375 = vmatprep.subr.mxu0 0.0
    %376 = vmatpush1.msra.mxu0 %v294
    %377 = vmatprep.subr.mxu0 0.0
    %378 = vmatpush1.msra.mxu0 %v293
    %379 = vmatprep.subr.mxu0 0.0
    %380 = vmatpush1.msra.mxu0 %v292
    %381 = vmatprep.subr.mxu0 0.0
    %382 = vmatpush1.msra.mxu0 %v291
    %383 = vmatprep.subr.mxu0 0.0
    %384 = vmatpush2.msra.mxu0 0.0
    %385 = vmatprep.subr.mxu0 0.0
    %386 = vmatpush2.msra.mxu0 0.0
    %387 = vmatprep.subr.mxu0 0.0
    %388 = vmatpush2.msra.mxu0 0.0
    %389 = vmatprep.subr.mxu0 0.0
    %390 = vmatpush2.msra.mxu0 0.0
    %391 = vmatprep.subr.mxu0 0.0
    %392 = vmatpush2.msra.mxu0 0.0
    %393 = vmatprep.subr.mxu0 0.0
    %394 = vmatpush2.msra.mxu0 0.0
    %395 = vmatprep.subr.mxu0 0.0
    %396 = vmatpush2.msra.mxu0 0.0
    %397 = vmatprep.subr.mxu0 0.0
    %398 = vmatpush2.msra.mxu0 0.0
    %399 = vmatprep.subr.mxu0 0.0
    %400 = vmatpush2.msra.mxu0 0.0
    %401 = vmatprep.subr.mxu0 0.0
    %402 = vmatpush2.msra.mxu0 0.0
    %403 = vmatprep.subr.mxu0 0.0
    %404 = vmatpush2.msra.mxu0 0.0
    %405 = vmatprep.subr.mxu0 0.0
    %406 = vmatpush2.msra.mxu0 0.0
    %407 = vmatprep.subr.mxu0 0.0
    %408 = vmatpush2.msra.mxu0 0.0
    %409 = vmatprep.subr.mxu0 0.0
    %410 = vmatpush2.msra.mxu0 0.0
    %411 = vmatprep.subr.mxu0 0.0
    %412 = vmatpush2.msra.mxu0 0.0
    %413 = vmatprep.subr.mxu0 0.0
    %414 = vmatpush2.msra.mxu0 0.0
    %415 = vmatprep.mubr.f32.mxu0 0.0
    %416 = vmatmul.mubr.f32.gmra.mxu0 %v304
    %v417 = vpop.f32.mrf.mxu0
    %v418 = vadd.f32 %v300, %v417
    %v419 = vpop.f32.mrf.mxu0
    %420 = vmatprep.mubr.f32.mxu0 0.0
    %421 = vmatmul.mubr.f32.gmra.mxu0 %v307
    %v422 = vpop.f32.mrf.mxu0
    %v423 = vadd.f32 %v300, %v422
    %v424 = vpop.f32.mrf.mxu0
    %425 = vmatprep.mubr.f32.mxu0 0.0
    %426 = vmatmul.mubr.f32.gmra.mxu0 %v310
    %v427 = vpop.f32.mrf.mxu0
    %v428 = vadd.f32 %v300, %v427
    %v429 = vpop.f32.mrf.mxu0
    %430 = vmatprep.mubr.f32.mxu0 0.0
    %431 = vmatmul.mubr.f32.gmra.mxu0 %v313
    %v432 = vpop.f32.mrf.mxu0
    %v433 = vadd.f32 %v300, %v432
    %v434 = vpop.f32.mrf.mxu0
    %435 = vmatprep.mubr.f32.mxu0 0.0
    %436 = vmatmul.mubr.f32.gmra.mxu0 %v316
    %v437 = vpop.f32.mrf.mxu0
    %v438 = vadd.f32 %v300, %v437
    %v439 = vpop.f32.mrf.mxu0
    %440 = vmatprep.mubr.f32.mxu0 0.0
    %441 = vmatmul.mubr.f32.gmra.mxu0 %v319
    %v442 = vpop.f32.mrf.mxu0
    %v443 = vadd.f32 %v300, %v442
    %v444 = vpop.f32.mrf.mxu0
    %445 = vmatprep.mubr.f32.mxu0 0.0
    %446 = vmatmul.mubr.f32.gmra.mxu0 %v322
    %v447 = vpop.f32.mrf.mxu0
    %v448 = vadd.f32 %v300, %v447
    %v449 = vpop.f32.mrf.mxu0
    %450 = vmatprep.mubr.f32.mxu0 0.0
    %451 = vmatmul.mubr.f32.gmra.mxu0 %v325
    %v452 = vpop.f32.mrf.mxu0
    %v453 = vadd.f32 %v300, %v452
    %v454 = vpop.f32.mrf.mxu0
    %455 = vmatprep.mubr.f32.mxu0 0.0
    %456 = vmatmul.mubr.f32.gmra.mxu0 %v328
    %v457 = vpop.f32.mrf.mxu0
    %v458 = vadd.f32 %v300, %v457
    %v459 = vpop.f32.mrf.mxu0
    %460 = vmatprep.mubr.f32.mxu0 0.0
    %461 = vmatmul.mubr.f32.gmra.mxu0 %v331
    %v462 = vpop.f32.mrf.mxu0
    %v463 = vadd.f32 %v300, %v462
    %v464 = vpop.f32.mrf.mxu0
    %465 = vmatprep.mubr.f32.mxu0 0.0
    %466 = vmatmul.mubr.f32.gmra.mxu0 %v334
    %v467 = vpop.f32.mrf.mxu0
    %v468 = vadd.f32 %v300, %v467
    %v469 = vpop.f32.mrf.mxu0
    %470 = vmatprep.mubr.f32.mxu0 0.0
    %471 = vmatmul.mubr.f32.gmra.mxu0 %v337
    %v472 = vpop.f32.mrf.mxu0
    %v473 = vadd.f32 %v300, %v472
    %v474 = vpop.f32.mrf.mxu0
    %475 = vmatprep.mubr.f32.mxu0 0.0
    %476 = vmatmul.mubr.f32.gmra.mxu0 %v340
    %v477 = vpop.f32.mrf.mxu0
    %v478 = vadd.f32 %v300, %v477
    %v479 = vpop.f32.mrf.mxu0
    %480 = vmatprep.mubr.f32.mxu0 0.0
    %481 = vmatmul.mubr.f32.gmra.mxu0 %v343
    %v482 = vpop.f32.mrf.mxu0
    %v483 = vadd.f32 %v300, %v482
    %v484 = vpop.f32.mrf.mxu0
    %485 = vmatprep.mubr.f32.mxu0 0.0
    %486 = vmatmul.mubr.f32.gmra.mxu0 %v346
    %v487 = vpop.f32.mrf.mxu0
    %v488 = vadd.f32 %v300, %v487
    %v489 = vpop.f32.mrf.mxu0
    %490 = vmatprep.mubr.f32.mxu0 0.0
    %491 = vmatmul.mubr.f32.gmra.mxu0 %v349
    %v492 = vpop.f32.mrf.mxu0
    %v493 = vadd.f32 %v300, %v492
    %v494 = vpop.f32.mrf.mxu0
    %495 = vdwg.mxu0
    %v496 = vtanh.pop %v418
    %v497 = vtanh.pop %v423
    %v498 = vtanh.pop %v428
    %v499 = vtanh.pop %v433
    %v500 = vtanh.pop %v438
    %v501 = vtanh.pop %v443
    %v502 = vtanh.pop %v448
    %v503 = vtanh.pop %v453
    %v504 = vtanh.pop %v458
    %v505 = vtanh.pop %v463
    %v506 = vtanh.pop %v468
    %v507 = vtanh.pop %v473
    %v508 = vtanh.pop %v478
    %v509 = vtanh.pop %v483
    %v510 = vtanh.pop %v488
    %v511 = vtanh.pop %v493
    %v512 = vld [vmem:[%s3] sm:$0xff]
    %v513 = vld [vmem:[%s3 + $0x8] sm:$0xff]
    %v514 = vld [vmem:[%s3 + $0x10] sm:$0xff]
    %v515 = vld [vmem:[%s3 + $0x18] sm:$0xff]
    %v516 = vld [vmem:[#allocation2] sm:$0x1]
    %v518 = vlaneseq
    %v519 = vshrl.u32 %v518, 7
    %v520 = vsub.s32 0, %v519
    %v521 = vrot.slane %v516, %v520
    %v524 = vsel %vm302, %v496, 0
    %v527 = vsel %vm302, %v497, 0
    %v530 = vsel %vm302, %v498, 0
    %v533 = vsel %vm302, %v499, 0
    %v536 = vsel %vm302, %v500, 0
    %v539 = vsel %vm302, %v501, 0
    %v542 = vsel %vm302, %v502, 0
    %v545 = vsel %vm302, %v503, 0
    %v548 = vsel %vm302, %v504, 0
    %v551 = vsel %vm302, %v505, 0
    %v554 = vsel %vm302, %v506, 0
    %v557 = vsel %vm302, %v507, 0
    %v560 = vsel %vm302, %v508, 0
    %v563 = vsel %vm302, %v509, 0
    %v566 = vsel %vm302, %v510, 0
    %v569 = vsel %vm302, %v511, 0
    %571 = vmatprep.subr.mxu0 0.0
    %572 = vmatpush1.msra.mxu0 0.0
    %573 = vmatprep.subr.mxu0 0.0
    %574 = vmatpush1.msra.mxu0 0.0
    %575 = vmatprep.subr.mxu0 0.0
    %576 = vmatpush1.msra.mxu0 0.0
    %577 = vmatprep.subr.mxu0 0.0
    %578 = vmatpush1.msra.mxu0 0.0
    %579 = vmatprep.subr.mxu0 0.0
    %580 = vmatpush1.msra.mxu0 0.0
    %581 = vmatprep.subr.mxu0 0.0
    %582 = vmatpush1.msra.mxu0 0.0
    %583 = vmatprep.subr.mxu0 0.0
    %584 = vmatpush1.msra.mxu0 0.0
    %585 = vmatprep.subr.mxu0 0.0
    %586 = vmatpush1.msra.mxu0 0.0
    %587 = vmatprep.subr.mxu0 0.0
    %588 = vmatpush1.msra.mxu0 0.0
    %589 = vmatprep.subr.mxu0 0.0
    %590 = vmatpush1.msra.mxu0 0.0
    %591 = vmatprep.subr.mxu0 0.0
    %592 = vmatpush1.msra.mxu0 0.0
    %593 = vmatprep.subr.mxu0 0.0
    %594 = vmatpush1.msra.mxu0 0.0
    %595 = vmatprep.subr.mxu0 0.0
    %596 = vmatpush1.msra.mxu0 %v515
    %597 = vmatprep.subr.mxu0 0.0
    %598 = vmatpush1.msra.mxu0 %v514
    %599 = vmatprep.subr.mxu0 0.0
    %600 = vmatpush1.msra.mxu0 %v513
    %601 = vmatprep.subr.mxu0 0.0
    %602 = vmatpush1.msra.mxu0 %v512
    %603 = vmatprep.subr.mxu0 0.0
    %604 = vmatpush2.msra.mxu0 0.0
    %605 = vmatprep.subr.mxu0 0.0
    %606 = vmatpush2.msra.mxu0 0.0
    %607 = vmatprep.subr.mxu0 0.0
    %608 = vmatpush2.msra.mxu0 0.0
    %609 = vmatprep.subr.mxu0 0.0
    %610 = vmatpush2.msra.mxu0 0.0
    %611 = vmatprep.subr.mxu0 0.0
    %612 = vmatpush2.msra.mxu0 0.0
    %613 = vmatprep.subr.mxu0 0.0
    %614 = vmatpush2.msra.mxu0 0.0
    %615 = vmatprep.subr.mxu0 0.0
    %616 = vmatpush2.msra.mxu0 0.0
    %617 = vmatprep.subr.mxu0 0.0
    %618 = vmatpush2.msra.mxu0 0.0
    %619 = vmatprep.subr.mxu0 0.0
    %620 = vmatpush2.msra.mxu0 0.0
    %621 = vmatprep.subr.mxu0 0.0
    %622 = vmatpush2.msra.mxu0 0.0
    %623 = vmatprep.subr.mxu0 0.0
    %624 = vmatpush2.msra.mxu0 0.0
    %625 = vmatprep.subr.mxu0 0.0
    %626 = vmatpush2.msra.mxu0 0.0
    %627 = vmatprep.subr.mxu0 0.0
    %628 = vmatpush2.msra.mxu0 0.0
    %629 = vmatprep.subr.mxu0 0.0
    %630 = vmatpush2.msra.mxu0 0.0
    %631 = vmatprep.subr.mxu0 0.0
    %632 = vmatpush2.msra.mxu0 0.0
    %633 = vmatprep.subr.mxu0 0.0
    %634 = vmatpush2.msra.mxu0 0.0
    %635 = vmatprep.mubr.f32.mxu0 0.0
    %636 = vmatmul.mubr.f32.gmra.mxu0 %v524
    %v637 = vpop.f32.mrf.mxu0
    %v638 = vadd.f32 %v521, %v637
    %v639 = vpop.f32.mrf.mxu0
    %640 = vmatprep.mubr.f32.mxu0 0.0
    %641 = vmatmul.mubr.f32.gmra.mxu0 %v527
    %v642 = vpop.f32.mrf.mxu0
    %v643 = vadd.f32 %v521, %v642
    %v644 = vpop.f32.mrf.mxu0
    %645 = vmatprep.mubr.f32.mxu0 0.0
    %646 = vmatmul.mubr.f32.gmra.mxu0 %v530
    %v647 = vpop.f32.mrf.mxu0
    %v648 = vadd.f32 %v521, %v647
    %v649 = vpop.f32.mrf.mxu0
    %650 = vmatprep.mubr.f32.mxu0 0.0
    %651 = vmatmul.mubr.f32.gmra.mxu0 %v533
    %v652 = vpop.f32.mrf.mxu0
    %v653 = vadd.f32 %v521, %v652
    %v654 = vpop.f32.mrf.mxu0
    %655 = vmatprep.mubr.f32.mxu0 0.0
    %656 = vmatmul.mubr.f32.gmra.mxu0 %v536
    %v657 = vpop.f32.mrf.mxu0
    %v658 = vadd.f32 %v521, %v657
    %v659 = vpop.f32.mrf.mxu0
    %660 = vmatprep.mubr.f32.mxu0 0.0
    %661 = vmatmul.mubr.f32.gmra.mxu0 %v539
    %v662 = vpop.f32.mrf.mxu0
    %v663 = vadd.f32 %v521, %v662
    %v664 = vpop.f32.mrf.mxu0
    %665 = vmatprep.mubr.f32.mxu0 0.0
    %666 = vmatmul.mubr.f32.gmra.mxu0 %v542
    %v667 = vpop.f32.mrf.mxu0
    %v668 = vadd.f32 %v521, %v667
    %v669 = vpop.f32.mrf.mxu0
    %670 = vmatprep.mubr.f32.mxu0 0.0
    %671 = vmatmul.mubr.f32.gmra.mxu0 %v545
    %v672 = vpop.f32.mrf.mxu0
    %v673 = vadd.f32 %v521, %v672
    %v674 = vpop.f32.mrf.mxu0
    %675 = vmatprep.mubr.f32.mxu0 0.0
    %676 = vmatmul.mubr.f32.gmra.mxu0 %v548
    %v677 = vpop.f32.mrf.mxu0
    %v678 = vadd.f32 %v521, %v677
    %v679 = vpop.f32.mrf.mxu0
    %680 = vmatprep.mubr.f32.mxu0 0.0
    %681 = vmatmul.mubr.f32.gmra.mxu0 %v551
    %v682 = vpop.f32.mrf.mxu0
    %v683 = vadd.f32 %v521, %v682
    %v684 = vpop.f32.mrf.mxu0
    %685 = vmatprep.mubr.f32.mxu0 0.0
    %686 = vmatmul.mubr.f32.gmra.mxu0 %v554
    %v687 = vpop.f32.mrf.mxu0
    %v688 = vadd.f32 %v521, %v687
    %v689 = vpop.f32.mrf.mxu0
    %690 = vmatprep.mubr.f32.mxu0 0.0
    %691 = vmatmul.mubr.f32.gmra.mxu0 %v557
    %v692 = vpop.f32.mrf.mxu0
    %v693 = vadd.f32 %v521, %v692
    %v694 = vpop.f32.mrf.mxu0
    %695 = vmatprep.mubr.f32.mxu0 0.0
    %696 = vmatmul.mubr.f32.gmra.mxu0 %v560
    %v697 = vpop.f32.mrf.mxu0
    %v698 = vadd.f32 %v521, %v697
    %v699 = vpop.f32.mrf.mxu0
    %700 = vmatprep.mubr.f32.mxu0 0.0
    %701 = vmatmul.mubr.f32.gmra.mxu0 %v563
    %v702 = vpop.f32.mrf.mxu0
    %v703 = vadd.f32 %v521, %v702
    %v704 = vpop.f32.mrf.mxu0
    %705 = vmatprep.mubr.f32.mxu0 0.0
    %706 = vmatmul.mubr.f32.gmra.mxu0 %v566
    %v707 = vpop.f32.mrf.mxu0
    %v708 = vadd.f32 %v521, %v707
    %v709 = vpop.f32.mrf.mxu0
    %710 = vmatprep.mubr.f32.mxu0 0.0
    %711 = vmatmul.mubr.f32.gmra.mxu0 %v569
    %v712 = vpop.f32.mrf.mxu0
    %v713 = vadd.f32 %v521, %v712
    %v714 = vpop.f32.mrf.mxu0
    %715 = vdwg.mxu0
    %732 = vset.pattern.permute.xlu0 0
    %733 = vperm.xlu0 %732, %v638
    %v734 = vpop.permute.xlu0 %733
    %735 = vset.pattern.permute.xlu0 0
    %736 = vperm.xlu0 %735, %v643
    %v737 = vpop.permute.xlu0 %736
    %738 = vset.pattern.permute.xlu0 0
    %739 = vperm.xlu0 %738, %v648
    %v740 = vpop.permute.xlu0 %739
    %741 = vset.pattern.permute.xlu0 0
    %742 = vperm.xlu0 %741, %v653
    %v743 = vpop.permute.xlu0 %742
    %744 = vset.pattern.permute.xlu0 0
    %745 = vperm.xlu0 %744, %v658
    %v746 = vpop.permute.xlu0 %745
    %747 = vset.pattern.permute.xlu0 0
    %748 = vperm.xlu0 %747, %v663
    %v749 = vpop.permute.xlu0 %748
    %750 = vset.pattern.permute.xlu0 0
    %751 = vperm.xlu0 %750, %v668
    %v752 = vpop.permute.xlu0 %751
    %753 = vset.pattern.permute.xlu0 0
    %754 = vperm.xlu0 %753, %v673
    %v755 = vpop.permute.xlu0 %754
    %756 = vset.pattern.permute.xlu0 0
    %757 = vperm.xlu0 %756, %v678
    %v758 = vpop.permute.xlu0 %757
    %759 = vset.pattern.permute.xlu0 0
    %760 = vperm.xlu0 %759, %v683
    %v761 = vpop.permute.xlu0 %760
    %762 = vset.pattern.permute.xlu0 0
    %763 = vperm.xlu0 %762, %v688
    %v764 = vpop.permute.xlu0 %763
    %765 = vset.pattern.permute.xlu0 0
    %766 = vperm.xlu0 %765, %v693
    %v767 = vpop.permute.xlu0 %766
    %768 = vset.pattern.permute.xlu0 0
    %769 = vperm.xlu0 %768, %v698
    %v770 = vpop.permute.xlu0 %769
    %771 = vset.pattern.permute.xlu0 0
    %772 = vperm.xlu0 %771, %v703
    %v773 = vpop.permute.xlu0 %772
    %774 = vset.pattern.permute.xlu0 0
    %775 = vperm.xlu0 %774, %v708
    %v776 = vpop.permute.xlu0 %775
    %777 = vset.pattern.permute.xlu0 0
    %778 = vperm.xlu0 %777, %v713
    %v779 = vpop.permute.xlu0 %778
    %v780 = vlaneseq
    %v781 = vand.u32 %v780, 127
    %v782 = vlaneseq
    %v783 = vshrl.u32 %v782, 7
    %v784 = vsub.s32 %v781, %v783
    %v785 = vrot.slane %v734, %v784
    %v786 = vadd.s32 %v781, 4294967288
    %v787 = vlaneseq
    %v788 = vshrl.u32 %v787, 7
    %v789 = vsub.s32 %v786, %v788
    %v790 = vrot.slane %v737, %v789
    %vm791 = vcmask 130112
    %v792 = vsel %vm791, %v790, %v785
    %v793 = vadd.s32 %v781, 4294967280
    %v794 = vlaneseq
    %v795 = vshrl.u32 %v794, 7
    %v796 = vsub.s32 %v793, %v795
    %v797 = vrot.slane %v740, %v796
    %vm798 = vcmask 195712
    %v799 = vsel %vm798, %v797, %v792
    %v800 = vadd.s32 %v781, 4294967272
    %v801 = vlaneseq
    %v802 = vshrl.u32 %v801, 7
    %v803 = vsub.s32 %v800, %v802
    %v804 = vrot.slane %v743, %v803
    %vm805 = vcmask 261312
    %v806 = vsel %vm805, %v804, %v799
    %v807 = vadd.s32 %v781, 4294967264
    %v808 = vlaneseq
    %v809 = vshrl.u32 %v808, 7
    %v810 = vsub.s32 %v807, %v809
    %v811 = vrot.slane %v746, %v810
    %vm812 = vcmask 326912
    %v813 = vsel %vm812, %v811, %v806
    %v814 = vadd.s32 %v781, 4294967256
    %v815 = vlaneseq
    %v816 = vshrl.u32 %v815, 7
    %v817 = vsub.s32 %v814, %v816
    %v818 = vrot.slane %v749, %v817
    %vm819 = vcmask 392512
    %v820 = vsel %vm819, %v818, %v813
    %v821 = vadd.s32 %v781, 4294967248
    %v822 = vlaneseq
    %v823 = vshrl.u32 %v822, 7
    %v824 = vsub.s32 %v821, %v823
    %v825 = vrot.slane %v752, %v824
    %vm826 = vcmask 458112
    %v827 = vsel %vm826, %v825, %v820
    %v828 = vadd.s32 %v781, 4294967240
    %v829 = vlaneseq
    %v830 = vshrl.u32 %v829, 7
    %v831 = vsub.s32 %v828, %v830
    %v832 = vrot.slane %v755, %v831
    %vm833 = vcmask 523712
    %v834 = vsel %vm833, %v832, %v827
    %v835 = vadd.s32 %v781, 4294967232
    %v836 = vlaneseq
    %v837 = vshrl.u32 %v836, 7
    %v838 = vsub.s32 %v835, %v837
    %v839 = vrot.slane %v758, %v838
    %vm840 = vcmask 589312
    %v841 = vsel %vm840, %v839, %v834
    %v842 = vadd.s32 %v781, 4294967224
    %v843 = vlaneseq
    %v844 = vshrl.u32 %v843, 7
    %v845 = vsub.s32 %v842, %v844
    %v846 = vrot.slane %v761, %v845
    %vm847 = vcmask 654912
    %v848 = vsel %vm847, %v846, %v841
    %v849 = vadd.s32 %v781, 4294967216
    %v850 = vlaneseq
    %v851 = vshrl.u32 %v850, 7
    %v852 = vsub.s32 %v849, %v851
    %v853 = vrot.slane %v764, %v852
    %vm854 = vcmask 720512
    %v855 = vsel %vm854, %v853, %v848
    %v856 = vadd.s32 %v781, 4294967208
    %v857 = vlaneseq
    %v858 = vshrl.u32 %v857, 7
    %v859 = vsub.s32 %v856, %v858
    %v860 = vrot.slane %v767, %v859
    %vm861 = vcmask 786112
    %v862 = vsel %vm861, %v860, %v855
    %v863 = vadd.s32 %v781, 4294967200
    %v864 = vlaneseq
    %v865 = vshrl.u32 %v864, 7
    %v866 = vsub.s32 %v863, %v865
    %v867 = vrot.slane %v770, %v866
    %vm868 = vcmask 851712
    %v869 = vsel %vm868, %v867, %v862
    %v870 = vadd.s32 %v781, 4294967192
    %v871 = vlaneseq
    %v872 = vshrl.u32 %v871, 7
    %v873 = vsub.s32 %v870, %v872
    %v874 = vrot.slane %v773, %v873
    %vm875 = vcmask 917312
    %v876 = vsel %vm875, %v874, %v869
    %v877 = vadd.s32 %v781, 4294967184
    %v878 = vlaneseq
    %v879 = vshrl.u32 %v878, 7
    %v880 = vsub.s32 %v877, %v879
    %v881 = vrot.slane %v776, %v880
    %vm882 = vcmask 982912
    %v883 = vsel %vm882, %v881, %v876
    %v884 = vadd.s32 %v781, 4294967176
    %v885 = vlaneseq
    %v886 = vshrl.u32 %v885, 7
    %v887 = vsub.s32 %v884, %v886
    %v888 = vrot.slane %v779, %v887
    %vm889 = vcmask 1048512
    %v890 = vsel %vm889, %v888, %v883
    %892 = vst [vmem:[%s7] sm:$0x1] %v890
    // Predicated region
    $region38: #{_forward_tiled.1} parent=1 // pred_check
      _
    $region39: #{_forward_tiled.1} parent=1 // pred_check_branch
      %894 = sbr.rel (0) target = $region41
    $region40: #{_forward_tiled.1} parent=1 // pred_region
      _
    $region41: #{_forward_tiled.1} parent=1 // pred_fallthru
      _
    // Predicated region
    $region42: #{_forward_tiled.1} parent=1 // pred_check
      _
    $region43: #{_forward_tiled.1} parent=1 // pred_check_branch
      %896 = sbr.rel (0) target = $region45
    $region44: #{_forward_tiled.1} parent=1 // pred_region
      _
    $region45: #{_forward_tiled.1} parent=1 // pred_fallthru
      _
    %897 = vsyncpa [#allocation4], 1
    %898 = vsyncpa [#allocation6], 1

</llo_original>
